<compile_context>
chip_gen: v7x
topology: tpu7x:2x2x1
jax: 0.10.0
libtpu: 0.0.40
codegen_flags: <defaults>
</compile_context>

<pallas_src>
import jax
import jax.numpy as jnp
from jax.experimental import pallas as pl
from jax.experimental.pallas import tpu as pltpu


def _scalenet_kernel(x_ref, w_ref, b_ref, o_ref):
    # x_ref: (1, C, TP) VMEM block, pixels lane-dense on the last axis.
    # w_ref: (C,) f32 in SMEM.  b_ref: (1,) f32 in SMEM (already bias + 0.1).
    # o_ref: (1, 1, TP) VMEM block (lane-dense output).
    C = x_ref.shape[1]
    acc = x_ref[0, 0:1, :] * w_ref[0]                 # (1, TP) VPU multiply
    for c in range(1, C):                              # unrolled at trace time
        acc = acc + x_ref[0, c:c + 1, :] * w_ref[c]    # VPU multiply-add
    y = jnp.exp(acc + b_ref[0])                        # EUP exp (own slot)
    o_ref[0] = jnp.maximum(y, 1e-4).astype(o_ref.dtype)


def scalenet_forward(x_nchw, weight, bias, *, max_pixels_per_block=32768):
    """x_nchw: (B, C, H, W) f32; weight: (C,) f32; bias: () f32 -> (B, 1, H, W)."""
    B, C, H, W = x_nchw.shape
    P = H * W

    # Free metadata reshape (NCHW is row-major over H, W): (B, C, H*W).
    x = x_nchw.reshape(B, C, P).astype(jnp.float32)

    # Pixel tile: full extent if small, else a large multiple of 128.
    if P <= max_pixels_per_block:
        TP = P
    else:
        TP = max_pixels_per_block  # multiple of 128; ragged tail handled by Pallas

    grid = (B, pl.cdiv(P, TP))

    w_sm = weight.astype(jnp.float32).reshape(C)
    b_sm = (bias.astype(jnp.float32) + jnp.float32(0.1)).reshape(1)  # fold +0.1

    out = pl.pallas_call(
        _scalenet_kernel,
        out_shape=jax.ShapeDtypeStruct((B, 1, P), jnp.float32),
        grid=grid,
        in_specs=[
            pl.BlockSpec((1, C, TP), lambda b, p: (b, 0, p)),
            pl.BlockSpec(memory_space=pltpu.MemorySpace.SMEM),
            pl.BlockSpec(memory_space=pltpu.MemorySpace.SMEM),
        ],
        out_specs=pl.BlockSpec((1, 1, TP), lambda b, p: (b, 0, p)),
        compiler_params=pltpu.CompilerParams(
            dimension_semantics=("parallel", "parallel"),
        ),
    )(x, w_sm, b_sm)

    # (B, 1, H*W) -> (B, 1, H, W): free reshape, no transpose needed.
    return out.reshape(B, 1, H, W)


def init_scalenet_params(dim, key):
    # Deterministic stand-in for Conv2d(dim, 1, 1) init scaled by 0.1
    # (PyTorch uses kaiming-uniform; exact values don't matter for this
    #  synthetic kernel, only the 0.1 scaling semantics of __init__).
    kw, kb = jax.random.split(key)
    bound = 1.0 / jnp.sqrt(dim)
    weight = jax.random.uniform(kw, (dim,), jnp.float32, -bound, bound) * 0.1
    bias = jax.random.uniform(kb, (), jnp.float32, -bound, bound) * 0.1
    return weight, bias


if __name__ == "__main__":
    key = jax.random.PRNGKey(0)
    k_x, k_p = jax.random.split(key)

    B, C, H, W = 2, 4, 16, 16
    x = jax.random.normal(k_x, (B, C, H, W), jnp.float32)
    weight, bias = init_scalenet_params(C, k_p)

    y = scalenet_forward(x, weight, bias)
    y = jax.block_until_ready(y)

    # Pure-JAX reference check of the 1x1-conv semantics.
    ref = jnp.exp(jnp.einsum("bchw,c->bhw", x, weight)[:, None, :, :] + bias + 0.1)
    ref = jnp.maximum(ref, 1e-4)
    assert y.shape == (B, 1, H, W)
    assert jnp.allclose(y, ref, atol=1e-5, rtol=1e-5)

    print("KERNEL_OK")
</pallas_src>

<mosaic_0001>
module attributes {stable_mosaic.version = 11 : i64} {
  func.func @_scalenet_kernel(%arg0: i32, %arg1: i32, %arg2: memref<1x4x256xf32, #tpu.memory_space<vmem>>, %arg3: memref<4xf32, #tpu.memory_space<smem>>, %arg4: memref<1xf32, #tpu.memory_space<smem>>, %arg5: memref<1x1x256xf32, #tpu.memory_space<vmem>>) attributes {dimension_semantics = [#tpu.dimension_semantics<parallel>, #tpu.dimension_semantics<parallel>], iteration_bounds = array<i64: 2, 1>, scalar_prefetch = 0 : i64, scratch_operands = 0 : i64, tpu.core_type = #tpu.core_type<tc>, window_params = [{transform_indices = @transform_0, window_bounds = array<i64: 1, 4, 256>}, {transform_indices = @transform_1, window_bounds = array<i64: 4>}, {transform_indices = @transform_2, window_bounds = array<i64: 1>}, {transform_indices = @transform_3, window_bounds = array<i64: 1, 1, 256>}]} {
    %c0 = arith.constant 0 : index
    %c0_0 = arith.constant 0 : index
    %c0_1 = arith.constant 0 : index
    %0 = vector.load %arg2[%c0, %c0_0, %c0_1] : memref<1x4x256xf32, #tpu.memory_space<vmem>>, vector<1x1x256xf32>
    %1 = vector.shape_cast %0 : vector<1x1x256xf32> to vector<1x256xf32>
    %c0_2 = arith.constant 0 : index
    %2 = memref.load %arg3[%c0_2] : memref<4xf32, #tpu.memory_space<smem>>
    %3 = vector.broadcast %2 : f32 to vector<1x256xf32>
    %4 = arith.mulf %1, %3 : vector<1x256xf32>
    %c0_3 = arith.constant 0 : index
    %c1 = arith.constant 1 : index
    %c0_4 = arith.constant 0 : index
    %5 = vector.load %arg2[%c0_3, %c1, %c0_4] : memref<1x4x256xf32, #tpu.memory_space<vmem>>, vector<1x1x256xf32>
    %6 = vector.shape_cast %5 : vector<1x1x256xf32> to vector<1x256xf32>
    %c1_5 = arith.constant 1 : index
    %7 = memref.load %arg3[%c1_5] : memref<4xf32, #tpu.memory_space<smem>>
    %8 = vector.broadcast %7 : f32 to vector<1x256xf32>
    %9 = arith.mulf %6, %8 : vector<1x256xf32>
    %10 = arith.addf %4, %9 : vector<1x256xf32>
    %c0_6 = arith.constant 0 : index
    %c2 = arith.constant 2 : index
    %c0_7 = arith.constant 0 : index
    %11 = vector.load %arg2[%c0_6, %c2, %c0_7] : memref<1x4x256xf32, #tpu.memory_space<vmem>>, vector<1x1x256xf32>
    %12 = vector.shape_cast %11 : vector<1x1x256xf32> to vector<1x256xf32>
    %c2_8 = arith.constant 2 : index
    %13 = memref.load %arg3[%c2_8] : memref<4xf32, #tpu.memory_space<smem>>
    %14 = vector.broadcast %13 : f32 to vector<1x256xf32>
    %15 = arith.mulf %12, %14 : vector<1x256xf32>
    %16 = arith.addf %10, %15 : vector<1x256xf32>
    %c0_9 = arith.constant 0 : index
    %c3 = arith.constant 3 : index
    %c0_10 = arith.constant 0 : index
    %17 = vector.load %arg2[%c0_9, %c3, %c0_10] : memref<1x4x256xf32, #tpu.memory_space<vmem>>, vector<1x1x256xf32>
    %18 = vector.shape_cast %17 : vector<1x1x256xf32> to vector<1x256xf32>
    %c3_11 = arith.constant 3 : index
    %19 = memref.load %arg3[%c3_11] : memref<4xf32, #tpu.memory_space<smem>>
    %20 = vector.broadcast %19 : f32 to vector<1x256xf32>
    %21 = arith.mulf %18, %20 : vector<1x256xf32>
    %22 = arith.addf %16, %21 : vector<1x256xf32>
    %c0_12 = arith.constant 0 : index
    %23 = memref.load %arg4[%c0_12] : memref<1xf32, #tpu.memory_space<smem>>
    %24 = vector.broadcast %23 : f32 to vector<1x256xf32>
    %25 = arith.addf %22, %24 : vector<1x256xf32>
    %26 = math.exp %25 : vector<1x256xf32>
    %cst = arith.constant 9.99999974E-5 : f32
    %27 = vector.broadcast %cst : f32 to vector<1x256xf32>
    %28 = arith.maximumf %26, %27 : vector<1x256xf32>
    %c0_13 = arith.constant 0 : index
    %c0_14 = arith.constant 0 : index
    %c0_15 = arith.constant 0 : index
    %29 = vector.load %arg5[%c0_13, %c0_14, %c0_15] : memref<1x1x256xf32, #tpu.memory_space<vmem>>, vector<1x1x256xf32>
    %30 = vector.shape_cast %29 : vector<1x1x256xf32> to vector<1x256xf32>
    %31 = vector.shape_cast %28 : vector<1x256xf32> to vector<1x1x256xf32>
    tpu.vector_store %arg5[%c0_13, %c0_14, %c0_15], %31 {strides = array<i32>} : memref<1x1x256xf32, #tpu.memory_space<vmem>>, vector<1x1x256xf32>,
    return
  }
  func.func @transform_0(%arg0: i32, %arg1: i32) -> (i32, i32, i32) {
    %c0_i32 = arith.constant 0 : i32
    %c0_i32_0 = arith.constant 0 : i32
    return %arg0, %c0_i32, %arg1 : i32, i32, i32
  }
  func.func @transform_1(%arg0: i32, %arg1: i32) -> i32 {
    %c0_i32 = arith.constant 0 : i32
    %c0_i32_0 = arith.constant 0 : i32
    return %c0_i32 : i32
  }
  func.func @transform_2(%arg0: i32, %arg1: i32) -> i32 {
    %c0_i32 = arith.constant 0 : i32
    %c0_i32_0 = arith.constant 0 : i32
    return %c0_i32 : i32
  }
  func.func @transform_3(%arg0: i32, %arg1: i32) -> (i32, i32, i32) {
    %c0_i32 = arith.constant 0 : i32
    %c0_i32_0 = arith.constant 0 : i32
    return %arg0, %c0_i32, %arg1 : i32, i32, i32
  }
}

</mosaic_0001>

<llo_original>
// kernel: tpu_custom_call.1
$region0: #{tpu_custom_call.1}
  #allocation0 [shape = 'u32[]', space=smem, size = 0x4, offset = 0x4, fixed_abs, tag = 'smem constant byte address 0x4 - core index']
  #allocation1 [shape = 'u32[144,128]{1,0:T(1,128)}', space=vmem, size = 0x12000, scoped, tag = 'internal scratch']
  #allocation2 [shape = 'f32[1]{0:T(128)S(6)}', space=smem, size = 0x200, scoped, tag = 'scoped memory for tpu_custom_call.1']
  %s0 = inlined_call_operand.hbm [shape: f32[2,4,256], index: 0, kind: input, shape index: {}]
  %s1 = inlined_call_operand.vmem [shape: f32[4], index: 1, kind: input, shape index: {}]
  %s2 = inlined_call_operand.<no memory space> [shape: f32[1], index: 2, kind: input, shape index: {}]
  %s3 = inlined_call_operand.hbm [shape: f32[2,1,256], index: 3, kind: output, shape index: {}]
  %s4 = sld [smem:[#allocation0]]
  $region53: #{tpu_custom_call.1} parent=0
    _
  %s6 = ssub.s32 1, %s4
  %s7 = scalar_select 0, %s6, %s4
  %8 = sst [smem:[#allocation2]] %s2
  $region1: #{tpu_custom_call.1} parent=0
    #allocation3 [shape = 'u8[8192]{0}', space=vmem, size = 0x2000, scoped, tag = 'input window, operand 0']
    #allocation4 [shape = 's32[2]{0}', space=sflag, size = 0x8, scoped, tag = 'scoped memory for tpu_custom_call.1']
    #allocation5 [shape = 's32[2]{0}', space=sflag, size = 0x8, scoped, tag = 'scoped memory for tpu_custom_call.1']
    #allocation6 [shape = 's32[2]{0}', space=sflag, size = 0x8, scoped, tag = 'scoped memory for tpu_custom_call.1']
    #allocation7 [shape = 'u8[512]{0}', space=smem, size = 0x200, scoped, tag = 'input window, operand 1, single buffered']
    #allocation8 [shape = 'u8[2048]{0}', space=vmem, size = 0x800, scoped, tag = 'output window, operand 0']
    %9 = vsyncpa [#allocation4], 0
    %s10 = scalar_lea.sflag [#allocation4], 1
    %11 = vsyncpa %s10, 0
    %12 = vsyncpa [#allocation6], 0
    %13 = vsyncpa [#allocation5], 0
    %s14 = scalar_lea.sflag [#allocation5], 1
    %15 = vsyncpa %s14, 0
    loop: start=0, step=1, limit=4
    $region2: #{tpu_custom_call.1} parent=1 // loop_pre_header
      _
    $region3: #{tpu_custom_call.1} parent=1 // loop_header
      %s17 = sphi 0, %s21
      %p18 = scmp.ge.s32.totalorder %s17, 4
      %s24 = sphi 0, %s36
      %s25 = sphi 0, %s32
      %s26 = sphi 0, %s24
      %s27 = sphi 0, %s25
      %s28 = sphi 0, %s26
      %s29 = sphi 0, %s27
      %s41 = sphi 0, %s43
      %s44 = sphi 0, %s41
      %s45 = sphi 0, %s44
      %s61 = sphi 0, %s45
      %s65 = sphi 0, %s65
      %s67 = sphi 0, %s65
      %s68 = sphi 0, %s67
      %s82 = sphi 0, %s68
      %s86 = sphi 0, %s86
      %s88 = sphi 0, %s86
      %s89 = sphi 0, %s88
      %s103 = sphi 0, %s89
      %s111 = sphi 0, %s113
      %s114 = sphi 0, %s111
      %s115 = sphi 0, %s114
      %s131 = sphi 0, %s115
    $region4: #{tpu_custom_call.1} parent=1 // loop_header_branch
      %20 = sbr.rel (%p18) target = $region8
    $region5: #{tpu_custom_call.1} parent=1 // loop_body
      %s22 = ssub.s32 %s17, 1
      %s23 = ssub.s32 %s17, 2
      %s30 = sadd.s32 1, %s25
      %p31 = scmp.ge.s32.totalorder %s30, 1
      %s32 = scalar_select %p31, 0, %s30
      %s33 = sadd.s32 1, %s24
      %s34 = scalar_select %p31, %s33, %s24
      %p35 = scmp.ge.s32.totalorder %s34, 2
      %s36 = scalar_select %p35, 0, %s34
      %s37 = ssub.s32 %s24, %s36
      %s38 = ssub.s32 %s25, %s32
      %s39 = sor.u32 %s37, %s38
      %p40 = scmp.eq.s32.totalorder %s39, 0
      %s42 = sadd.s32 %s41, 1
      %s43 = scalar_select %p40, %s41, %s42
      %p46 = pneg %p40
      %p47 = scmp.eq.s32.totalorder %s17, 1
      %p48 = por %p46, %p47
      %p49 = scmp.ne.s32.totalorder %s41, %s44
      %p50 = scmp.eq.s32.totalorder %s17, 0
      %p51 = por %p49, %p50
      %p52 = scmp.ne.s32.totalorder %s41, %s44
      %p53 = scmp.eq.s32.totalorder %s22, 1
      %p54 = por %p52, %p53
      %p55 = scmp.ne.s32.totalorder %s44, %s45
      %p56 = scmp.eq.s32.totalorder %s22, 0
      %p57 = por %p55, %p56
      %p58 = scmp.ne.s32.totalorder %s44, %s45
      %p59 = scmp.eq.s32.totalorder %s23, 1
      %p60 = por %p58, %p59
      %p62 = scmp.ne.s32.totalorder %s45, %s61
      %p63 = scmp.eq.s32.totalorder %s23, 0
      %p64 = por %p62, %p63
      %s66 = sadd.s32 %s65, 1
      %p69 = scmp.eq.s32.totalorder %s17, 1
      %p70 = scmp.ne.s32.totalorder %s65, %s67
      %p71 = scmp.eq.s32.totalorder %s17, 0
      %p72 = por %p70, %p71
      %p73 = scmp.ne.s32.totalorder %s65, %s67
      %p74 = scmp.eq.s32.totalorder %s22, 1
      %p75 = por %p73, %p74
      %p76 = scmp.ne.s32.totalorder %s67, %s68
      %p77 = scmp.eq.s32.totalorder %s22, 0
      %p78 = por %p76, %p77
      %p79 = scmp.ne.s32.totalorder %s67, %s68
      %p80 = scmp.eq.s32.totalorder %s23, 1
      %p81 = por %p79, %p80
      %p83 = scmp.ne.s32.totalorder %s68, %s82
      %p84 = scmp.eq.s32.totalorder %s23, 0
      %p85 = por %p83, %p84
      %s87 = sadd.s32 %s86, 1
      %p90 = scmp.eq.s32.totalorder %s17, 1
      %p91 = scmp.ne.s32.totalorder %s86, %s88
      %p92 = scmp.eq.s32.totalorder %s17, 0
      %p93 = por %p91, %p92
      %p94 = scmp.ne.s32.totalorder %s86, %s88
      %p95 = scmp.eq.s32.totalorder %s22, 1
      %p96 = por %p94, %p95
      %p97 = scmp.ne.s32.totalorder %s88, %s89
      %p98 = scmp.eq.s32.totalorder %s22, 0
      %p99 = por %p97, %p98
      %p100 = scmp.ne.s32.totalorder %s88, %s89
      %p101 = scmp.eq.s32.totalorder %s23, 1
      %p102 = por %p100, %p101
      %p104 = scmp.ne.s32.totalorder %s89, %s103
      %p105 = scmp.eq.s32.totalorder %s23, 0
      %p106 = por %p104, %p105
      %s107 = ssub.s32 %s24, %s36
      %s108 = ssub.s32 %s25, %s32
      %s109 = sor.u32 %s107, %s108
      %p110 = scmp.eq.s32.totalorder %s109, 0
      %s112 = sadd.s32 %s111, 1
      %s113 = scalar_select %p110, %s111, %s112
      %p116 = pneg %p110
      %p117 = scmp.eq.s32.totalorder %s17, 1
      %p118 = por %p116, %p117
      %p119 = scmp.ne.s32.totalorder %s111, %s114
      %p120 = scmp.eq.s32.totalorder %s17, 0
      %p121 = por %p119, %p120
      %p122 = scmp.ne.s32.totalorder %s111, %s114
      %p123 = scmp.eq.s32.totalorder %s22, 1
      %p124 = por %p122, %p123
      %p125 = scmp.ne.s32.totalorder %s114, %s115
      %p126 = scmp.eq.s32.totalorder %s22, 0
      %p127 = por %p125, %p126
      %p128 = scmp.ne.s32.totalorder %s114, %s115
      %p129 = scmp.eq.s32.totalorder %s23, 1
      %p130 = por %p128, %p129
      %p132 = scmp.ne.s32.totalorder %s115, %s131
      %p133 = scmp.eq.s32.totalorder %s23, 0
      %p134 = por %p132, %p133
      %p135 = scmp.le.s32.totalorder 1, %s17
      %p136 = scmp.lt.s32.totalorder %s17, 3
      %p137 = pnand %p135, %p136
      %p138 = pneg %p137
      // Predicated region
      $region9: #{tpu_custom_call.1} parent=5 // pred_check
        _
      $region10: #{tpu_custom_call.1} parent=5 // pred_check_branch
        %140 = sbr.rel (%p137) target = $region12
      $region11: #{tpu_custom_call.1} parent=5 // pred_region
        %s141 = ssub.s32 %s17, 1
        // Predicated region
        $region13: #{tpu_custom_call.1} parent=11 // pred_check
          %p142 = pneg %p78
        $region14: #{tpu_custom_call.1} parent=11 // pred_check_branch
          %144 = sbr.rel (%p142) target = $region16
        $region15: #{tpu_custom_call.1} parent=11 // pred_region
          %s146 = ssub.s32 16, 16
          %147 = vsyncadd [#allocation6], %s146
          %s149 = sshll.u32 %s1, 4
          %s150 = int_to_ptr.vmem [resolvable:$true] %s149
          %152 = dma.vmem_to_smem %s150, 16, [#allocation7], [#allocation6]
        $region16: #{tpu_custom_call.1} parent=11 // pred_fallthru
          _
        // Predicated region
        $region17: #{tpu_custom_call.1} parent=11 // pred_check
          %p153 = pneg %p99
        $region18: #{tpu_custom_call.1} parent=11 // pred_check_branch
          %155 = sbr.rel (%p153) target = $region20
        $region19: #{tpu_custom_call.1} parent=11 // pred_region
          _
        $region20: #{tpu_custom_call.1} parent=11 // pred_fallthru
          _
      $region12: #{tpu_custom_call.1} parent=5 // pred_fallthru
        _
      %p156 = scmp.lt.s32.totalorder %s17, 2
      // Predicated region
      $region21: #{tpu_custom_call.1} parent=5 // pred_check
        %p157 = pneg %p156
      $region22: #{tpu_custom_call.1} parent=5 // pred_check_branch
        %159 = sbr.rel (%p157) target = $region24
      $region23: #{tpu_custom_call.1} parent=5 // pred_region
        // Predicated region
        $region25: #{tpu_custom_call.1} parent=23 // pred_check
          %p160 = pneg %p51
        $region26: #{tpu_custom_call.1} parent=23 // pred_check_branch
          %162 = sbr.rel (%p160) target = $region28
        $region27: #{tpu_custom_call.1} parent=23 // pred_region
          %s163 = sand.u32 %s41, 1
          %s164 = scalar_lea.sflag [#allocation4], %s163
          %s165 = sand.u32 %s41, 1
          %s166 = smul.addr %s165, 8
          %s167 = scalar_lea.vmem [#allocation3], %s166
          %s168 = smul.u32 2, %s25
          %s170 = ssub.s32 128, 128
          %171 = vsyncadd %s164, %s170
          %s172 = smul.addr %s24, 2
          %s173 = sadd.s32 %s168, %s172
          %s174 = smul.addr %s173, 64
          %s175 = scalar_lea.hbm %s0, %s174
          %s177 = sshll.u32 %s167, 4
          %s178 = int_to_ptr.vmem [resolvable:$true] %s177
          %180 = dma.hbm_to_vmem [thread:$0]  %s175, 128, %s178, %s164
        $region28: #{tpu_custom_call.1} parent=23 // pred_fallthru
          _
      $region24: #{tpu_custom_call.1} parent=5 // pred_fallthru
        _
      %p181 = scmp.le.s32.totalorder 1, %s17
      %p182 = scmp.lt.s32.totalorder %s17, 3
      %p183 = pnand %p181, %p182
      %p184 = pneg %p183
      // Predicated region
      $region29: #{tpu_custom_call.1} parent=5 // pred_check
        _
      $region30: #{tpu_custom_call.1} parent=5 // pred_check_branch
        %186 = sbr.rel (%p183) target = $region32
      $region31: #{tpu_custom_call.1} parent=5 // pred_region
        %s187 = ssub.s32 %s17, 1
        %s188 = sand.u32 %s44, 1
        %s189 = scalar_lea.sflag [#allocation4], %s188
        %s190 = sand.u32 %s44, 1
        %s191 = smul.addr %s190, 8
        %s192 = scalar_lea.vmem [#allocation3], %s191
        // Predicated region
        $region33: #{tpu_custom_call.1} parent=31 // pred_check
          %p193 = pneg %p57
        $region34: #{tpu_custom_call.1} parent=31 // pred_check_branch
          %195 = sbr.rel (%p193) target = $region36
        $region35: #{tpu_custom_call.1} parent=31 // pred_region
          %196 = dma.done %s189, 128
        $region36: #{tpu_custom_call.1} parent=31 // pred_fallthru
          _
        // Predicated region
        $region37: #{tpu_custom_call.1} parent=31 // pred_check
          %p197 = pneg %p78
        $region38: #{tpu_custom_call.1} parent=31 // pred_check_branch
          %199 = sbr.rel (%p197) target = $region40
        $region39: #{tpu_custom_call.1} parent=31 // pred_region
          %200 = dma.done [#allocation6], 16
        $region40: #{tpu_custom_call.1} parent=31 // pred_fallthru
          _
        %201 = sfence
        %s202 = sand.u32 %s44, 1
        %s203 = scalar_lea.sflag [#allocation4], %s202
        %s204 = sand.u32 %s44, 1
        %s205 = smul.addr %s204, 8
        %s206 = scalar_lea.vmem [#allocation3], %s205
        %p207 = pneg %p57
        %p208 = pneg %p54
        %p209 = pneg %p78
        %p210 = pneg %p75
        %p211 = pneg %p99
        %p212 = pneg %p96
        %p213 = pneg %p127
        %p214 = pneg %p124
        %s215 = sand.u32 %s114, 1
        %s216 = scalar_lea.sflag [#allocation5], %s215
        %s217 = sand.u32 %s114, 1
        %s218 = smul.addr %s217, 2
        %s219 = scalar_lea.vmem [#allocation8], %s218
        %s220 = smul.u32 2, %s27
        %s221 = smul.u32 2, %s27
        %v222 = vld [vmem:[%s192] ss:$4 sm:$0x3]
        %s223 = sld [smem:[#allocation7]]
        %v224 = vstv %s223
        %v225 = vmul.f32 %v222, %v224
        %s226 = scalar_lea.vmem %s192, 1 [#allocation3]
        %v227 = vld [vmem:[%s226] ss:$4 sm:$0x3]
        %s228 = sld [smem:[#allocation7 + $0x1]]
        %v229 = vstv %s228
        %v230 = vmul.f32 %v227, %v229
        %v231 = vadd.f32 %v225, %v230
        %s232 = scalar_lea.vmem %s192, 2 [#allocation3]
        %v233 = vld [vmem:[%s232] ss:$4 sm:$0x3]
        %s234 = sld [smem:[#allocation7 + $0x2]]
        %v235 = vstv %s234
        %v236 = vmul.f32 %v233, %v235
        %v237 = vadd.f32 %v231, %v236
        %s238 = scalar_lea.vmem %s192, 3 [#allocation3]
        %v239 = vld [vmem:[%s238] ss:$4 sm:$0x3]
        %s240 = sld [smem:[#allocation7 + $0x3]]
        %v241 = vstv %s240
        %v242 = vmul.f32 %v239, %v241
        %v243 = vadd.f32 %v237, %v242
        %s244 = sld [smem:[#allocation2]]
        %v245 = vstv %s244
        %v246 = vadd.f32 %v243, %v245
        %v247 = vmul.f32 %v246, 1.442695
        %v248 = vpow.pop %v247
        %v249 = vmax.f32 %v248, 0.0001
        %v250 = vlaneseq
        %vm251 = vcmp.ge.s32.totalorder %v250, 0
        %vm252 = vcmp.lt.s32.totalorder %v250, 256
        %vm253 = vmand %vm251, %vm252
        %254 = vst.msk [vmem:[%s219] sm:$0x3] %vm253, %v249
        %s255 = sand.u32 %s114, 1
        %s256 = scalar_lea.sflag [#allocation5], %s255
        %s257 = sand.u32 %s114, 1
        %s258 = smul.addr %s257, 2
        %s259 = scalar_lea.vmem [#allocation8], %s258
        // Predicated region
        $region41: #{tpu_custom_call.1} parent=31 // pred_check
          %p260 = pneg %p124
        $region42: #{tpu_custom_call.1} parent=31 // pred_check_branch
          %262 = sbr.rel (%p260) target = $region44
        $region43: #{tpu_custom_call.1} parent=31 // pred_region
          %s263 = smul.u32 2, %s27
          %s265 = ssub.s32 32, 32
          %266 = vsyncadd %s256, %s265
          %s267 = smul.addr %s26, 2
          %s268 = sadd.s32 %s263, %s267
          %s269 = smul.addr %s268, 16
          %s270 = scalar_lea.hbm %s3, %s269
          %s272 = sshll.u32 %s259, 4
          %s273 = int_to_ptr.vmem [resolvable:$true] %s272
          %275 = dma.vmem_to_hbm [thread:$0]  %s273, 32, %s270, %s256
        $region44: #{tpu_custom_call.1} parent=31 // pred_fallthru
          _
      $region32: #{tpu_custom_call.1} parent=5 // pred_fallthru
        _
      %p276 = scmp.le.s32.totalorder 2, %s17
      // Predicated region
      $region45: #{tpu_custom_call.1} parent=5 // pred_check
        %p277 = pneg %p276
      $region46: #{tpu_custom_call.1} parent=5 // pred_check_branch
        %279 = sbr.rel (%p277) target = $region48
      $region47: #{tpu_custom_call.1} parent=5 // pred_region
        %s280 = ssub.s32 %s17, 2
        // Predicated region
        $region49: #{tpu_custom_call.1} parent=47 // pred_check
          %p281 = pneg %p130
        $region50: #{tpu_custom_call.1} parent=47 // pred_check_branch
          %283 = sbr.rel (%p281) target = $region52
        $region51: #{tpu_custom_call.1} parent=47 // pred_region
          %s284 = sand.u32 %s115, 1
          %s285 = scalar_lea.sflag [#allocation5], %s284
          %s286 = sand.u32 %s115, 1
          %s287 = smul.addr %s286, 2
          %s288 = scalar_lea.vmem [#allocation8], %s287
          %289 = dma.done %s285, 32
        $region52: #{tpu_custom_call.1} parent=47 // pred_fallthru
          _
      $region48: #{tpu_custom_call.1} parent=5 // pred_fallthru
        _
    $region6: #{tpu_custom_call.1} parent=1 // loop_footer
      %s21 = sadd.s32 1, %s17
    $region7: #{tpu_custom_call.1} parent=1 // loop_footer_branch
      %16 = sbr.rel target = $region3
    $region8: #{tpu_custom_call.1} parent=1 // loop_exit
      _
    %290 = vsyncpa [#allocation4], 1
    %s291 = scalar_lea.sflag [#allocation4], 1
    %292 = vsyncpa %s291, 1
    %293 = vsyncpa [#allocation5], 1
    %s294 = scalar_lea.sflag [#allocation5], 1
    %295 = vsyncpa %s294, 1
    %296 = vsyncpa [#allocation6], 1
    %s297 = scalar_lea.sflag [#allocation6], 1
    %298 = vsyncpa %s297, 1

</llo_original>
